<compile_context>
chip_gen: v7x
topology: tpu7x:2x2x1
jax: 0.10.0
libtpu: 0.0.40
codegen_flags: <defaults>
</compile_context>

<pallas_src>
import functools

import jax
import jax.numpy as jnp
from jax import lax
from jax.experimental import pallas as pl
from jax.experimental.pallas import tpu as pltpu


def _round_up(n, m):
    return ((n + m - 1) // m) * m


def _vmem_budget():
    """Generation-aware scoped-VMEM limit and tile working-set budget."""
    try:
        phys = int(pltpu.get_tpu_info().vmem_capacity_bytes)
    except Exception:
        phys = 64 * 1024 * 1024  # conservative fallback (v7x per-TensorCore VMEM)
    limit = min(max(phys // 2, 32 * 1024 * 1024), 96 * 1024 * 1024)
    return limit, (limit * 3) // 4


def _choose_row_tile(M, d_eff, f_eff, x_item, f_item, o_item, const_bytes,
                     tile_budget, target=512):
    """Largest row tile (multiple of sublane packing) fitting the VMEM budget,
    guaranteeing >= 2 grid steps when M allows (keeps both v7x TCs busy)."""
    sub = max(8, 32 // min(x_item, o_item))
    # Double-buffered x / film / out tiles + ~6 live f32 [rt, d_eff] temporaries
    # (x_f32, x^2, ms, h, scale, shift).
    per_row = (2 * x_item * d_eff + 2 * f_item * f_eff + 2 * o_item * d_eff
               + 6 * 4 * d_eff)
    budget = max(tile_budget - const_bytes, sub * per_row)
    rt = min(target, budget // per_row)
    rt = max(sub, (rt // sub) * sub)
    if rt >= M:
        if M >= 2 * sub:
            # Split into at least two blocks so both v7x TensorCores get work.
            rt = _round_up(pl.cdiv(M, 2), sub)
        else:
            rt = M  # single block == full array (always a legal block shape)
    return int(rt)


def _film_kernel(*refs, eps, cast_dtype, packed):
    if packed:
        x_ref, film_ref, msmat_ref, ws_ref, wsh_ref, bs_ref, bsh_ref, o_ref = refs
    else:
        x_ref, film_ref, ws_ref, wsh_ref, bs_ref, bsh_ref, o_ref = refs

    # --- RMS norm of x in float32 (matches self._norm(x.float())) ---
    x_f32 = x_ref[...].astype(jnp.float32)
    sq = x_f32 * x_f32
    if packed:
        # Segmented mean over each dim-wide segment of the lane-packed row via a
        # tiny block-diagonal averaging matmul (keeps everything 128-lane dense).
        ms = jnp.dot(sq, msmat_ref[...], preferred_element_type=jnp.float32)
    else:
        ms = jnp.mean(sq, axis=-1, keepdims=True)
    h = x_f32 * lax.rsqrt(ms + eps)
    if cast_dtype is not None:
        # `.type_as(x)` round-trip only changes numerics when x is not f32.
        h = h.astype(cast_dtype).astype(jnp.float32)

    # --- scale/shift: two MXU matmuls against resident weight halves ---
    f = film_ref[...]
    scale = jnp.dot(f, ws_ref[...], preferred_element_type=jnp.float32) + bs_ref[...]
    shift = jnp.dot(f, wsh_ref[...], preferred_element_type=jnp.float32) + bsh_ref[...]

    # --- FiLM modulation ---
    o_ref[...] = (h * scale + shift).astype(o_ref.dtype)


def film_forward(x, film, w_t, b, *, eps=1e-4, row_tile=None):
    """x: [..., dim], film: [..., film_dim], w_t: [film_dim, 2*dim], b: [2*dim]."""
    orig_shape = x.shape
    dim = x.shape[-1]
    film_dim = film.shape[-1]
    out_dtype = x.dtype

    x2 = x.reshape(-1, dim)
    f2 = film.reshape(-1, film_dim)
    M = x2.shape[0]

    # Split weights into scale/shift halves; biases hoisted to f32.
    w_scale = w_t[:, :dim]
    w_shift = w_t[:, dim:]
    b_f32 = b.astype(jnp.float32)
    b_scale = b_f32[:dim]
    b_shift = b_f32[dim:]

    # bf16-native MXU on v6e/v7x: keep low-precision operands low precision.
    if film.dtype in (jnp.bfloat16, jnp.float16):
        w_scale = w_scale.astype(film.dtype)
        w_shift = w_shift.astype(film.dtype)
    else:
        w_scale = w_scale.astype(jnp.float32)
        w_shift = w_shift.astype(jnp.float32)

    # Lane-dense packing for small dim: k rows per 128-lane slab (free reshape).
    packed = (dim < 128 and 128 % dim == 0)
    k = 128 // dim if packed else 1
    packed = packed and (M % k == 0)
    if packed:
        d_eff, f_eff, M_eff = k * dim, k * film_dim, M // k
        x2 = x2.reshape(M_eff, d_eff)
        f2 = f2.reshape(M_eff, f_eff)
        eye_w = jnp.eye(k, dtype=w_scale.dtype)
        w_scale = jnp.kron(eye_w, w_scale)          # block-diagonal [k*fd, k*dim]
        w_shift = jnp.kron(eye_w, w_shift)
        b_scale = jnp.tile(b_scale, k)
        b_shift = jnp.tile(b_shift, k)
        msmat = jnp.kron(jnp.eye(k, dtype=jnp.float32),
                         jnp.full((dim, dim), 1.0 / dim, dtype=jnp.float32))
    else:
        d_eff, f_eff, M_eff = dim, film_dim, M
        msmat = None
    b_scale = b_scale.reshape(1, d_eff)
    b_shift = b_shift.reshape(1, d_eff)

    consts = ([msmat] if packed else []) + [w_scale, w_shift, b_scale, b_shift]
    cast_dtype = None if x.dtype == jnp.float32 else x.dtype
    vmem_limit, tile_budget = _vmem_budget()

    def run(single_buffer_consts):
        const_bytes = sum(int(c.size) * int(c.dtype.itemsize) for c in consts)
        const_bytes *= (1 if single_buffer_consts else 2)
        rt = row_tile
        if rt is None:
            rt = _choose_row_tile(
                M_eff, d_eff, f_eff,
                int(x2.dtype.itemsize), int(f2.dtype.itemsize),
                int(jnp.dtype(out_dtype).itemsize),
                const_bytes, tile_budget)
        n_tiles = int(pl.cdiv(M_eff, rt))

        def const_spec(shape):
            if single_buffer_consts:
                # Grid-constant operand: one VMEM buffer is enough.
                return pl.BlockSpec(shape, lambda i: (0, 0),
                                    pipeline_mode=pl.Buffered(1))
            return pl.BlockSpec(shape, lambda i: (0, 0))

        in_specs = ([pl.BlockSpec((rt, d_eff), lambda i: (i, 0)),   # x rows
                     pl.BlockSpec((rt, f_eff), lambda i: (i, 0))]   # film rows
                    + [const_spec(tuple(c.shape)) for c in consts])

        kernel = functools.partial(_film_kernel, eps=eps,
                                   cast_dtype=cast_dtype, packed=packed)

        return pl.pallas_call(
            kernel,
            out_shape=jax.ShapeDtypeStruct((M_eff, d_eff), out_dtype),
            grid_spec=pltpu.PrefetchScalarGridSpec(
                num_scalar_prefetch=0,
                grid=(n_tiles,),
                in_specs=in_specs,
                out_specs=pl.BlockSpec((rt, d_eff), lambda i: (i, 0)),
            ),
            compiler_params=pltpu.CompilerParams(
                dimension_semantics=("parallel",),
                vmem_limit_bytes=vmem_limit,
            ),
        )(x2, f2, *consts)

    try:
        out = run(True)
    except Exception:
        # Runtime rejected Buffered(1) (or similar) -> default double buffering.
        out = run(False)

    return out.reshape(orig_shape)


def film_reference(x, film, w_t, b, eps=1e-4):
    x_f32 = x.astype(jnp.float32)
    h = (x_f32 * lax.rsqrt(jnp.mean(x_f32 * x_f32, axis=-1, keepdims=True) + eps)
         ).astype(x.dtype)
    ss = film.astype(jnp.float32) @ w_t.astype(jnp.float32) + b.astype(jnp.float32)
    dim = x.shape[-1]
    scale, shift = ss[..., :dim], ss[..., dim:]
    return (h.astype(jnp.float32) * scale + shift).astype(x.dtype)


if __name__ == "__main__":
    B, S, DIM, FILM_DIM = 2, 8, 32, 16
    EPS = 1e-4

    key = jax.random.PRNGKey(0)
    kx, kf, kw, kb, kx2, kf2 = jax.random.split(key, 6)

    x = jax.random.normal(kx, (B, S, DIM), dtype=jnp.float32)
    film = jax.random.normal(kf, (B, S, FILM_DIM), dtype=jnp.float32)

    # nn.Linear(film_dim, 2*dim): weight [2*dim, film_dim], bias [2*dim].
    bound = 1.0 / (FILM_DIM ** 0.5)
    w = jax.random.uniform(kw, (2 * DIM, FILM_DIM), minval=-bound, maxval=bound,
                           dtype=jnp.float32)
    b = jax.random.uniform(kb, (2 * DIM,), minval=-bound, maxval=bound,
                           dtype=jnp.float32)
    w_t = w.T  # [film_dim, 2*dim] so the kernel computes film @ W^T

    # Case 1: divisible rows -> lane-packed path (dim=32 packed 4 rows per slab).
    out = jax.block_until_ready(film_forward(x, film, w_t, b, eps=EPS))
    ref = film_reference(x, film, w_t, b, eps=EPS)
    assert out.shape == x.shape
    assert jnp.allclose(out, ref, atol=2e-5, rtol=2e-5), "mismatch (packed path)"

    # Case 2: non-divisible row count (M=21) -> pad-free partial trailing block.
    x2 = jax.random.normal(kx2, (3, 7, DIM), dtype=jnp.float32)
    film2 = jax.random.normal(kf2, (3, 7, FILM_DIM), dtype=jnp.float32)
    out2 = jax.block_until_ready(film_forward(x2, film2, w_t, b, eps=EPS))
    ref2 = film_reference(x2, film2, w_t, b, eps=EPS)
    assert out2.shape == x2.shape
    assert jnp.allclose(out2, ref2, atol=2e-5, rtol=2e-5), "mismatch (partial block)"

    print("KERNEL_OK")
</pallas_src>

<mosaic_0001>
module attributes {stable_mosaic.version = 11 : i64} {
  func.func @_film_kernel(%arg0: i32, %arg1: memref<4x128xf32, #tpu.memory_space<vmem>>, %arg2: memref<4x64xf32, #tpu.memory_space<vmem>>, %arg3: memref<128x128xf32, #tpu.memory_space<vmem>>, %arg4: memref<64x128xf32, #tpu.memory_space<vmem>>, %arg5: memref<64x128xf32, #tpu.memory_space<vmem>>, %arg6: memref<1x128xf32, #tpu.memory_space<vmem>>, %arg7: memref<1x128xf32, #tpu.memory_space<vmem>>, %arg8: memref<4x128xf32, #tpu.memory_space<vmem>>) attributes {dimension_semantics = [#tpu.dimension_semantics<parallel>], iteration_bounds = array<i64: 1>, scalar_prefetch = 0 : i64, scratch_operands = 0 : i64, tpu.core_type = #tpu.core_type<tc>, window_params = [{transform_indices = @transform_0, window_bounds = array<i64: 4, 128>}, {transform_indices = @transform_1, window_bounds = array<i64: 4, 64>}, {pipeline_mode = #tpu.pipeline_mode<synchronous>, transform_indices = @transform_2, window_bounds = array<i64: 128, 128>}, {pipeline_mode = #tpu.pipeline_mode<synchronous>, transform_indices = @transform_3, window_bounds = array<i64: 64, 128>}, {pipeline_mode = #tpu.pipeline_mode<synchronous>, transform_indices = @transform_4, window_bounds = array<i64: 64, 128>}, {pipeline_mode = #tpu.pipeline_mode<synchronous>, transform_indices = @transform_5, window_bounds = array<i64: 1, 128>}, {pipeline_mode = #tpu.pipeline_mode<synchronous>, transform_indices = @transform_6, window_bounds = array<i64: 1, 128>}, {transform_indices = @transform_7, window_bounds = array<i64: 4, 128>}]} {
    %c0 = arith.constant 0 : index
    %c0_0 = arith.constant 0 : index
    %0 = vector.load %arg1[%c0, %c0_0] : memref<4x128xf32, #tpu.memory_space<vmem>>, vector<4x128xf32>
    %1 = arith.mulf %0, %0 : vector<4x128xf32>
    %c0_1 = arith.constant 0 : index
    %c0_2 = arith.constant 0 : index
    %2 = vector.load %arg3[%c0_1, %c0_2] : memref<128x128xf32, #tpu.memory_space<vmem>>, vector<128x128xf32>
    %cst = arith.constant dense<0.000000e+00> : vector<4x128xf32>
    %3 = tpu.matmul %1, %2, %cst {dimension_numbers = #tpu.dot_dimension_numbers<[1], [0], [0], [1], [0, 0, 1, 1], [], []>} : vector<4x128xf32>, vector<128x128xf32>, vector<4x128xf32> -> vector<4x128xf32>
    %cst_3 = arith.constant 9.99999974E-5 : f32
    %4 = vector.broadcast %cst_3 : f32 to vector<4x128xf32>
    %5 = arith.addf %3, %4 : vector<4x128xf32>
    %6 = math.rsqrt %5 : vector<4x128xf32>
    %7 = arith.mulf %0, %6 : vector<4x128xf32>
    %c0_4 = arith.constant 0 : index
    %c0_5 = arith.constant 0 : index
    %8 = vector.load %arg2[%c0_4, %c0_5] : memref<4x64xf32, #tpu.memory_space<vmem>>, vector<4x64xf32>
    %c0_6 = arith.constant 0 : index
    %c0_7 = arith.constant 0 : index
    %9 = vector.load %arg4[%c0_6, %c0_7] : memref<64x128xf32, #tpu.memory_space<vmem>>, vector<64x128xf32>
    %cst_8 = arith.constant dense<0.000000e+00> : vector<4x128xf32>
    %10 = tpu.matmul %8, %9, %cst_8 {dimension_numbers = #tpu.dot_dimension_numbers<[1], [0], [0], [1], [0, 0, 1, 1], [], []>} : vector<4x64xf32>, vector<64x128xf32>, vector<4x128xf32> -> vector<4x128xf32>
    %c0_9 = arith.constant 0 : index
    %c0_10 = arith.constant 0 : index
    %11 = vector.load %arg6[%c0_9, %c0_10] : memref<1x128xf32, #tpu.memory_space<vmem>>, vector<1x128xf32>
    %12 = vector.broadcast %11 : vector<1x128xf32> to vector<4x128xf32>
    %13 = arith.addf %10, %12 : vector<4x128xf32>
    %c0_11 = arith.constant 0 : index
    %c0_12 = arith.constant 0 : index
    %14 = vector.load %arg5[%c0_11, %c0_12] : memref<64x128xf32, #tpu.memory_space<vmem>>, vector<64x128xf32>
    %cst_13 = arith.constant dense<0.000000e+00> : vector<4x128xf32>
    %15 = tpu.matmul %8, %14, %cst_13 {dimension_numbers = #tpu.dot_dimension_numbers<[1], [0], [0], [1], [0, 0, 1, 1], [], []>} : vector<4x64xf32>, vector<64x128xf32>, vector<4x128xf32> -> vector<4x128xf32>
    %c0_14 = arith.constant 0 : index
    %c0_15 = arith.constant 0 : index
    %16 = vector.load %arg7[%c0_14, %c0_15] : memref<1x128xf32, #tpu.memory_space<vmem>>, vector<1x128xf32>
    %17 = vector.broadcast %16 : vector<1x128xf32> to vector<4x128xf32>
    %18 = arith.addf %15, %17 : vector<4x128xf32>
    %19 = arith.mulf %7, %13 : vector<4x128xf32>
    %20 = arith.addf %19, %18 : vector<4x128xf32>
    %c0_16 = arith.constant 0 : index
    %c0_17 = arith.constant 0 : index
    %21 = vector.load %arg8[%c0_16, %c0_17] : memref<4x128xf32, #tpu.memory_space<vmem>>, vector<4x128xf32>
    tpu.vector_store %arg8[%c0_16, %c0_17], %20 {strides = array<i32>} : memref<4x128xf32, #tpu.memory_space<vmem>>, vector<4x128xf32>,
    return
  }
  func.func @transform_0(%arg0: i32) -> (i32, i32) {
    %c0_i32 = arith.constant 0 : i32
    %c0_i32_0 = arith.constant 0 : i32
    return %arg0, %c0_i32 : i32, i32
  }
  func.func @transform_1(%arg0: i32) -> (i32, i32) {
    %c0_i32 = arith.constant 0 : i32
    %c0_i32_0 = arith.constant 0 : i32
    return %arg0, %c0_i32 : i32, i32
  }
  func.func @transform_2(%arg0: i32) -> (i32, i32) {
    %c0_i32 = arith.constant 0 : i32
    %c0_i32_0 = arith.constant 0 : i32
    %c0_i32_1 = arith.constant 0 : i32
    return %c0_i32, %c0_i32_0 : i32, i32
  }
  func.func @transform_3(%arg0: i32) -> (i32, i32) {
    %c0_i32 = arith.constant 0 : i32
    %c0_i32_0 = arith.constant 0 : i32
    %c0_i32_1 = arith.constant 0 : i32
    return %c0_i32, %c0_i32_0 : i32, i32
  }
  func.func @transform_4(%arg0: i32) -> (i32, i32) {
    %c0_i32 = arith.constant 0 : i32
    %c0_i32_0 = arith.constant 0 : i32
    %c0_i32_1 = arith.constant 0 : i32
    return %c0_i32, %c0_i32_0 : i32, i32
  }
  func.func @transform_5(%arg0: i32) -> (i32, i32) {
    %c0_i32 = arith.constant 0 : i32
    %c0_i32_0 = arith.constant 0 : i32
    %c0_i32_1 = arith.constant 0 : i32
    return %c0_i32, %c0_i32_0 : i32, i32
  }
  func.func @transform_6(%arg0: i32) -> (i32, i32) {
    %c0_i32 = arith.constant 0 : i32
    %c0_i32_0 = arith.constant 0 : i32
    %c0_i32_1 = arith.constant 0 : i32
    return %c0_i32, %c0_i32_0 : i32, i32
  }
  func.func @transform_7(%arg0: i32) -> (i32, i32) {
    %c0_i32 = arith.constant 0 : i32
    %c0_i32_0 = arith.constant 0 : i32
    return %arg0, %c0_i32 : i32, i32
  }
}

module attributes {stable_mosaic.version = 11 : i64} {
  func.func @_film_kernel(%arg0: i32, %arg1: memref<4x128xf32, #tpu.memory_space<vmem>>, %arg2: memref<4x64xf32, #tpu.memory_space<vmem>>, %arg3: memref<128x128xf32, #tpu.memory_space<vmem>>, %arg4: memref<64x128xf32, #tpu.memory_space<vmem>>, %arg5: memref<64x128xf32, #tpu.memory_space<vmem>>, %arg6: memref<1x128xf32, #tpu.memory_space<vmem>>, %arg7: memref<1x128xf32, #tpu.memory_space<vmem>>, %arg8: memref<4x128xf32, #tpu.memory_space<vmem>>) attributes {dimension_semantics = [#tpu.dimension_semantics<parallel>], iteration_bounds = array<i64: 1>, scalar_prefetch = 0 : i64, scratch_operands = 0 : i64, tpu.core_type = #tpu.core_type<tc>, window_params = [{transform_indices = @transform_0, window_bounds = array<i64: 4, 128>}, {transform_indices = @transform_1, window_bounds = array<i64: 4, 64>}, {pipeline_mode = #tpu.pipeline_mode<synchronous>, transform_indices = @transform_2, window_bounds = array<i64: 128, 128>}, {pipeline_mode = #tpu.pipeline_mode<synchronous>, transform_indices = @transform_3, window_bounds = array<i64: 64, 128>}, {pipeline_mode = #tpu.pipeline_mode<synchronous>, transform_indices = @transform_4, window_bounds = array<i64: 64, 128>}, {pipeline_mode = #tpu.pipeline_mode<synchronous>, transform_indices = @transform_5, window_bounds = array<i64: 1, 128>}, {pipeline_mode = #tpu.pipeline_mode<synchronous>, transform_indices = @transform_6, window_bounds = array<i64: 1, 128>}, {transform_indices = @transform_7, window_bounds = array<i64: 4, 128>}]} {
    %c0 = arith.constant 0 : index
    %c0_0 = arith.constant 0 : index
    %0 = vector.load %arg1[%c0, %c0_0] : memref<4x128xf32, #tpu.memory_space<vmem>>, vector<4x128xf32>
    %1 = arith.mulf %0, %0 : vector<4x128xf32>
    %c0_1 = arith.constant 0 : index
    %c0_2 = arith.constant 0 : index
    %2 = vector.load %arg3[%c0_1, %c0_2] : memref<128x128xf32, #tpu.memory_space<vmem>>, vector<128x128xf32>
    %cst = arith.constant dense<0.000000e+00> : vector<4x128xf32>
    %3 = tpu.matmul %1, %2, %cst {dimension_numbers = #tpu.dot_dimension_numbers<[1], [0], [0], [1], [0, 0, 1, 1], [], []>} : vector<4x128xf32>, vector<128x128xf32>, vector<4x128xf32> -> vector<4x128xf32>
    %cst_3 = arith.constant 9.99999974E-5 : f32
    %4 = vector.broadcast %cst_3 : f32 to vector<4x128xf32>
    %5 = arith.addf %3, %4 : vector<4x128xf32>
    %6 = math.rsqrt %5 : vector<4x128xf32>
    %7 = arith.mulf %0, %6 : vector<4x128xf32>
    %c0_4 = arith.constant 0 : index
    %c0_5 = arith.constant 0 : index
    %8 = vector.load %arg2[%c0_4, %c0_5] : memref<4x64xf32, #tpu.memory_space<vmem>>, vector<4x64xf32>
    %c0_6 = arith.constant 0 : index
    %c0_7 = arith.constant 0 : index
    %9 = vector.load %arg4[%c0_6, %c0_7] : memref<64x128xf32, #tpu.memory_space<vmem>>, vector<64x128xf32>
    %cst_8 = arith.constant dense<0.000000e+00> : vector<4x128xf32>
    %10 = tpu.matmul %8, %9, %cst_8 {dimension_numbers = #tpu.dot_dimension_numbers<[1], [0], [0], [1], [0, 0, 1, 1], [], []>} : vector<4x64xf32>, vector<64x128xf32>, vector<4x128xf32> -> vector<4x128xf32>
    %c0_9 = arith.constant 0 : index
    %c0_10 = arith.constant 0 : index
    %11 = vector.load %arg6[%c0_9, %c0_10] : memref<1x128xf32, #tpu.memory_space<vmem>>, vector<1x128xf32>
    %12 = vector.broadcast %11 : vector<1x128xf32> to vector<4x128xf32>
    %13 = arith.addf %10, %12 : vector<4x128xf32>
    %c0_11 = arith.constant 0 : index
    %c0_12 = arith.constant 0 : index
    %14 = vector.load %arg5[%c0_11, %c0_12] : memref<64x128xf32, #tpu.memory_space<vmem>>, vector<64x128xf32>
    %cst_13 = arith.constant dense<0.000000e+00> : vector<4x128xf32>
    %15 = tpu.matmul %8, %14, %cst_13 {dimension_numbers = #tpu.dot_dimension_numbers<[1], [0], [0], [1], [0, 0, 1, 1], [], []>} : vector<4x64xf32>, vector<64x128xf32>, vector<4x128xf32> -> vector<4x128xf32>
    %c0_14 = arith.constant 0 : index
    %c0_15 = arith.constant 0 : index
    %16 = vector.load %arg7[%c0_14, %c0_15] : memref<1x128xf32, #tpu.memory_space<vmem>>, vector<1x128xf32>
    %17 = vector.broadcast %16 : vector<1x128xf32> to vector<4x128xf32>
    %18 = arith.addf %15, %17 : vector<4x128xf32>
    %19 = arith.mulf %7, %13 : vector<4x128xf32>
    %20 = arith.addf %19, %18 : vector<4x128xf32>
    %c0_16 = arith.constant 0 : index
    %c0_17 = arith.constant 0 : index
    %21 = vector.load %arg8[%c0_16, %c0_17] : memref<4x128xf32, #tpu.memory_space<vmem>>, vector<4x128xf32>
    tpu.vector_store %arg8[%c0_16, %c0_17], %20 {strides = array<i32>} : memref<4x128xf32, #tpu.memory_space<vmem>>, vector<4x128xf32>,
    return
  }
  func.func @transform_0(%arg0: i32) -> (i32, i32) {
    %c0_i32 = arith.constant 0 : i32
    %c0_i32_0 = arith.constant 0 : i32
    return %arg0, %c0_i32 : i32, i32
  }
  func.func @transform_1(%arg0: i32) -> (i32, i32) {
    %c0_i32 = arith.constant 0 : i32
    %c0_i32_0 = arith.constant 0 : i32
    return %arg0, %c0_i32 : i32, i32
  }
  func.func @transform_2(%arg0: i32) -> (i32, i32) {
    %c0_i32 = arith.constant 0 : i32
    %c0_i32_0 = arith.constant 0 : i32
    %c0_i32_1 = arith.constant 0 : i32
    return %c0_i32, %c0_i32_0 : i32, i32
  }
  func.func @transform_3(%arg0: i32) -> (i32, i32) {
    %c0_i32 = arith.constant 0 : i32
    %c0_i32_0 = arith.constant 0 : i32
    %c0_i32_1 = arith.constant 0 : i32
    return %c0_i32, %c0_i32_0 : i32, i32
  }
  func.func @transform_4(%arg0: i32) -> (i32, i32) {
    %c0_i32 = arith.constant 0 : i32
    %c0_i32_0 = arith.constant 0 : i32
    %c0_i32_1 = arith.constant 0 : i32
    return %c0_i32, %c0_i32_0 : i32, i32
  }
  func.func @transform_5(%arg0: i32) -> (i32, i32) {
    %c0_i32 = arith.constant 0 : i32
    %c0_i32_0 = arith.constant 0 : i32
    %c0_i32_1 = arith.constant 0 : i32
    return %c0_i32, %c0_i32_0 : i32, i32
  }
  func.func @transform_6(%arg0: i32) -> (i32, i32) {
    %c0_i32 = arith.constant 0 : i32
    %c0_i32_0 = arith.constant 0 : i32
    %c0_i32_1 = arith.constant 0 : i32
    return %c0_i32, %c0_i32_0 : i32, i32
  }
  func.func @transform_7(%arg0: i32) -> (i32, i32) {
    %c0_i32 = arith.constant 0 : i32
    %c0_i32_0 = arith.constant 0 : i32
    return %arg0, %c0_i32 : i32, i32
  }
}

</mosaic_0001>

<llo_original>
// kernel: tpu_custom_call.1
$region0: #{tpu_custom_call.1}
  #allocation0 [shape = 'u32[]', space=smem, size = 0x4, offset = 0x4, fixed_abs, tag = 'smem constant byte address 0x4 - core index']
  #allocation1 [shape = 'u32[144,128]{1,0:T(1,128)}', space=vmem, size = 0x12000, scoped, tag = 'internal scratch']
  %s0 = inlined_call_operand.hbm [shape: f32[4,128], index: 0, kind: input, shape index: {}]
  %s1 = inlined_call_operand.hbm [shape: f32[4,64], index: 1, kind: input, shape index: {}]
  %s2 = inlined_call_operand.hbm [shape: f32[128,128], index: 2, kind: input, shape index: {}]
  %s3 = inlined_call_operand.hbm [shape: f32[64,128], index: 3, kind: input, shape index: {}]
  %s4 = inlined_call_operand.hbm [shape: f32[64,128], index: 4, kind: input, shape index: {}]
  %s5 = inlined_call_operand.vmem [shape: f32[1,128], index: 5, kind: input, shape index: {}]
  %s6 = inlined_call_operand.vmem [shape: f32[1,128], index: 6, kind: input, shape index: {}]
  %s7 = inlined_call_operand.hbm [shape: f32[4,128], index: 7, kind: output, shape index: {}]
  %s8 = sld [smem:[#allocation0]]
  $region58: #{tpu_custom_call.1} parent=0
    _
  %s10 = ssub.s32 1, %s8
  %s11 = scalar_select 0, %s10, %s8
  $region1: #{tpu_custom_call.1} parent=0
    #allocation2 [shape = 'u8[2048]{0}', space=vmem, size = 0x800, scoped, tag = 'input window, operand 0, single buffered']
    #allocation3 [shape = 's32[1]{0}', space=sflag, size = 0x4, scoped, tag = 'scoped memory for tpu_custom_call.1']
    #allocation4 [shape = 's32[1]{0}', space=sflag, size = 0x4, scoped, tag = 'scoped memory for tpu_custom_call.1']
    #allocation5 [shape = 'u8[2048]{0}', space=vmem, size = 0x800, scoped, tag = 'input window, operand 1, single buffered']
    #allocation6 [shape = 's32[1]{0}', space=sflag, size = 0x4, scoped, tag = 'scoped memory for tpu_custom_call.1']
    #allocation7 [shape = 'u8[65536]{0}', space=vmem, size = 0x10000, scoped, tag = 'input window, operand 2, single buffered']
    #allocation8 [shape = 'u8[32768]{0}', space=vmem, size = 0x8000, scoped, tag = 'input window, operand 3, single buffered']
    #allocation9 [shape = 's32[1]{0}', space=sflag, size = 0x4, scoped, tag = 'scoped memory for tpu_custom_call.1']
    #allocation10 [shape = 'u8[32768]{0}', space=vmem, size = 0x8000, scoped, tag = 'input window, operand 4, single buffered']
    #allocation11 [shape = 'u8[2048]{0}', space=vmem, size = 0x800, scoped, tag = 'output window, operand 0, single buffered']
    %12 = vsyncpa [#allocation3], 0
    %13 = vsyncpa [#allocation6], 0
    %14 = vsyncpa [#allocation9], 0
    %15 = vsyncpa [#allocation4], 0
    // Predicated region
    $region2: #{tpu_custom_call.1} parent=1 // pred_check
      _
    $region3: #{tpu_custom_call.1} parent=1 // pred_check_branch
      %17 = sbr.rel (0) target = $region5
    $region4: #{tpu_custom_call.1} parent=1 // pred_region
      %s19 = ssub.s32 64, 64
      %20 = vsyncadd [#allocation3], %s19
      %s22 = sshll.u32 [#allocation2], 4
      %s23 = int_to_ptr.vmem [resolvable:$true] %s22
      %25 = dma.hbm_to_vmem [thread:$0]  %s0, 64, %s23, [#allocation3]
    $region5: #{tpu_custom_call.1} parent=1 // pred_fallthru
      _
    // Predicated region
    $region6: #{tpu_custom_call.1} parent=1 // pred_check
      _
    $region7: #{tpu_custom_call.1} parent=1 // pred_check_branch
      %27 = sbr.rel (0) target = $region9
    $region8: #{tpu_custom_call.1} parent=1 // pred_region
      %s29 = ssub.s32 64, 64
      %30 = vsyncadd [#allocation6], %s29
      %s32 = sshll.u32 [#allocation5], 4
      %s33 = int_to_ptr.vmem [resolvable:$true] %s32
      %35 = dma.hbm_to_vmem [thread:$0]  %s1, 64, %s33, [#allocation6]
    $region9: #{tpu_custom_call.1} parent=1 // pred_fallthru
      _
    // Predicated region
    $region10: #{tpu_custom_call.1} parent=1 // pred_check
      _
    $region11: #{tpu_custom_call.1} parent=1 // pred_check_branch
      %37 = sbr.rel (0) target = $region13
    $region12: #{tpu_custom_call.1} parent=1 // pred_region
      %s39 = ssub.s32 2048, 2048
      %40 = vsyncadd [#allocation6], %s39
      %s41 = sshll.u32 [#allocation7], 4
      %s42 = int_to_ptr.vmem [resolvable:$true] %s41
      %47 = dma.hbm_to_vmem [thread:$0]  %s2, 2048, %s42, [#allocation6], 128, 128, 8
    $region13: #{tpu_custom_call.1} parent=1 // pred_fallthru
      _
    // Predicated region
    $region14: #{tpu_custom_call.1} parent=1 // pred_check
      _
    $region15: #{tpu_custom_call.1} parent=1 // pred_check_branch
      %49 = sbr.rel (0) target = $region17
    $region16: #{tpu_custom_call.1} parent=1 // pred_region
      %s51 = ssub.s32 1024, 1024
      %52 = vsyncadd [#allocation9], %s51
      %s53 = sshll.u32 [#allocation8], 4
      %s54 = int_to_ptr.vmem [resolvable:$true] %s53
      %59 = dma.hbm_to_vmem [thread:$0]  %s3, 1024, %s54, [#allocation9], 128, 128, 8
    $region17: #{tpu_custom_call.1} parent=1 // pred_fallthru
      _
    // Predicated region
    $region18: #{tpu_custom_call.1} parent=1 // pred_check
      _
    $region19: #{tpu_custom_call.1} parent=1 // pred_check_branch
      %61 = sbr.rel (0) target = $region21
    $region20: #{tpu_custom_call.1} parent=1 // pred_region
      %s63 = ssub.s32 1024, 1024
      %64 = vsyncadd [#allocation9], %s63
      %s65 = sshll.u32 [#allocation10], 4
      %s66 = int_to_ptr.vmem [resolvable:$true] %s65
      %71 = dma.hbm_to_vmem [thread:$0]  %s4, 1024, %s66, [#allocation9], 128, 128, 8
    $region21: #{tpu_custom_call.1} parent=1 // pred_fallthru
      _
    // Predicated region
    $region22: #{tpu_custom_call.1} parent=1 // pred_check
      _
    $region23: #{tpu_custom_call.1} parent=1 // pred_check_branch
      %73 = sbr.rel (0) target = $region25
    $region24: #{tpu_custom_call.1} parent=1 // pred_region
      _
    $region25: #{tpu_custom_call.1} parent=1 // pred_fallthru
      _
    // Predicated region
    $region26: #{tpu_custom_call.1} parent=1 // pred_check
      _
    $region27: #{tpu_custom_call.1} parent=1 // pred_check_branch
      %75 = sbr.rel (0) target = $region29
    $region28: #{tpu_custom_call.1} parent=1 // pred_region
      _
    $region29: #{tpu_custom_call.1} parent=1 // pred_fallthru
      _
    // Predicated region
    $region30: #{tpu_custom_call.1} parent=1 // pred_check
      _
    $region31: #{tpu_custom_call.1} parent=1 // pred_check_branch
      %77 = sbr.rel (0) target = $region33
    $region32: #{tpu_custom_call.1} parent=1 // pred_region
      %78 = dma.done [#allocation3], 64
    $region33: #{tpu_custom_call.1} parent=1 // pred_fallthru
      _
    // Predicated region
    $region34: #{tpu_custom_call.1} parent=1 // pred_check
      _
    $region35: #{tpu_custom_call.1} parent=1 // pred_check_branch
      %80 = sbr.rel (0) target = $region37
    $region36: #{tpu_custom_call.1} parent=1 // pred_region
      %81 = dma.done [#allocation6], 64
    $region37: #{tpu_custom_call.1} parent=1 // pred_fallthru
      _
    // Predicated region
    $region38: #{tpu_custom_call.1} parent=1 // pred_check
      _
    $region39: #{tpu_custom_call.1} parent=1 // pred_check_branch
      %83 = sbr.rel (0) target = $region41
    $region40: #{tpu_custom_call.1} parent=1 // pred_region
      %84 = dma.done [#allocation6], 2048
    $region41: #{tpu_custom_call.1} parent=1 // pred_fallthru
      _
    // Predicated region
    $region42: #{tpu_custom_call.1} parent=1 // pred_check
      _
    $region43: #{tpu_custom_call.1} parent=1 // pred_check_branch
      %86 = sbr.rel (0) target = $region45
    $region44: #{tpu_custom_call.1} parent=1 // pred_region
      %87 = dma.done [#allocation9], 1024
    $region45: #{tpu_custom_call.1} parent=1 // pred_fallthru
      _
    // Predicated region
    $region46: #{tpu_custom_call.1} parent=1 // pred_check
      _
    $region47: #{tpu_custom_call.1} parent=1 // pred_check_branch
      %89 = sbr.rel (0) target = $region49
    $region48: #{tpu_custom_call.1} parent=1 // pred_region
      %90 = dma.done [#allocation9], 1024
    $region49: #{tpu_custom_call.1} parent=1 // pred_fallthru
      _
    %v91 = vld [vmem:[#allocation2] sm:$0xf]
    %v92 = vmul.f32 %v91, %v91
    %v93 = vld [vmem:[#allocation7] sm:$0xff]
    %v94 = vld [vmem:[#allocation7 + $0x8] sm:$0xff]
    %v95 = vld [vmem:[#allocation7 + $0x10] sm:$0xff]
    %v96 = vld [vmem:[#allocation7 + $0x18] sm:$0xff]
    %v97 = vld [vmem:[#allocation7 + $0x20] sm:$0xff]
    %v98 = vld [vmem:[#allocation7 + $0x28] sm:$0xff]
    %v99 = vld [vmem:[#allocation7 + $0x30] sm:$0xff]
    %v100 = vld [vmem:[#allocation7 + $0x38] sm:$0xff]
    %v101 = vld [vmem:[#allocation7 + $0x40] sm:$0xff]
    %v102 = vld [vmem:[#allocation7 + $0x48] sm:$0xff]
    %v103 = vld [vmem:[#allocation7 + $0x50] sm:$0xff]
    %v104 = vld [vmem:[#allocation7 + $0x58] sm:$0xff]
    %v105 = vld [vmem:[#allocation7 + $0x60] sm:$0xff]
    %v106 = vld [vmem:[#allocation7 + $0x68] sm:$0xff]
    %v107 = vld [vmem:[#allocation7 + $0x70] sm:$0xff]
    %v108 = vld [vmem:[#allocation7 + $0x78] sm:$0xff]
    %109 = vmatprep.subr.mxu0 0.0
    %110 = vmatpush1.msra.mxu0 %v93
    %111 = vmatprep.subr.mxu0 0.0
    %112 = vmatpush1.msra.mxu0 %v94
    %113 = vmatprep.subr.mxu0 0.0
    %114 = vmatpush1.msra.mxu0 %v95
    %115 = vmatprep.subr.mxu0 0.0
    %116 = vmatpush1.msra.mxu0 %v96
    %117 = vmatprep.subr.mxu0 0.0
    %118 = vmatpush1.msra.mxu0 %v97
    %119 = vmatprep.subr.mxu0 0.0
    %120 = vmatpush1.msra.mxu0 %v98
    %121 = vmatprep.subr.mxu0 0.0
    %122 = vmatpush1.msra.mxu0 %v99
    %123 = vmatprep.subr.mxu0 0.0
    %124 = vmatpush1.msra.mxu0 %v100
    %125 = vmatprep.subr.mxu0 0.0
    %126 = vmatpush1.msra.mxu0 %v101
    %127 = vmatprep.subr.mxu0 0.0
    %128 = vmatpush1.msra.mxu0 %v102
    %129 = vmatprep.subr.mxu0 0.0
    %130 = vmatpush1.msra.mxu0 %v103
    %131 = vmatprep.subr.mxu0 0.0
    %132 = vmatpush1.msra.mxu0 %v104
    %133 = vmatprep.subr.mxu0 0.0
    %134 = vmatpush1.msra.mxu0 %v105
    %135 = vmatprep.subr.mxu0 0.0
    %136 = vmatpush1.msra.mxu0 %v106
    %137 = vmatprep.subr.mxu0 0.0
    %138 = vmatpush1.msra.mxu0 %v107
    %139 = vmatprep.subr.mxu0 0.0
    %140 = vmatpush1.msra.mxu0 %v108
    %141 = vmatprep.subr.mxu0 0.0
    %142 = vmatpush1.msra.mxu0 0.0
    %143 = vmatprep.subr.mxu0 0.0
    %144 = vmatpush1.msra.mxu0 0.0
    %145 = vmatprep.subr.mxu0 0.0
    %146 = vmatpush1.msra.mxu0 0.0
    %147 = vmatprep.subr.mxu0 0.0
    %148 = vmatpush1.msra.mxu0 0.0
    %149 = vmatprep.subr.mxu0 0.0
    %150 = vmatpush1.msra.mxu0 0.0
    %151 = vmatprep.subr.mxu0 0.0
    %152 = vmatpush1.msra.mxu0 0.0
    %153 = vmatprep.subr.mxu0 0.0
    %154 = vmatpush1.msra.mxu0 0.0
    %155 = vmatprep.subr.mxu0 0.0
    %156 = vmatpush1.msra.mxu0 0.0
    %157 = vmatprep.subr.mxu0 0.0
    %158 = vmatpush1.msra.mxu0 0.0
    %159 = vmatprep.subr.mxu0 0.0
    %160 = vmatpush1.msra.mxu0 0.0
    %161 = vmatprep.subr.mxu0 0.0
    %162 = vmatpush1.msra.mxu0 0.0
    %163 = vmatprep.subr.mxu0 0.0
    %164 = vmatpush1.msra.mxu0 0.0
    %165 = vmatprep.subr.mxu0 0.0
    %166 = vmatpush1.msra.mxu0 0.0
    %167 = vmatprep.subr.mxu0 0.0
    %168 = vmatpush1.msra.mxu0 0.0
    %169 = vmatprep.subr.mxu0 0.0
    %170 = vmatpush1.msra.mxu0 0.0
    %171 = vmatprep.subr.mxu0 0.0
    %172 = vmatpush1.msra.mxu0 0.0
    %173 = vmatprep.mubr.f32.mxu0 0.0
    %174 = vmatmul.mubr.f32.gmra.mrb[0].mxu0 %v92
    %v175 = vpop.f32.mrb[0].mxu0
    %v176 = vadd.f32 0.0001, %v175
    %v177 = vpop.f32.mrb[0].mxu0
    %178 = vdwg.mxu0
    %v179 = vrsqrt.pop %v176
    %v180 = vmul.f32 %v91, %v179
    %v181 = vld [vmem:[#allocation5] sm:$0xf]
    %v182 = vld [vmem:[#allocation8] sm:$0xff]
    %v183 = vld [vmem:[#allocation8 + $0x8] sm:$0xff]
    %v184 = vld [vmem:[#allocation8 + $0x10] sm:$0xff]
    %v185 = vld [vmem:[#allocation8 + $0x18] sm:$0xff]
    %v186 = vld [vmem:[#allocation8 + $0x20] sm:$0xff]
    %v187 = vld [vmem:[#allocation8 + $0x28] sm:$0xff]
    %v188 = vld [vmem:[#allocation8 + $0x30] sm:$0xff]
    %v189 = vld [vmem:[#allocation8 + $0x38] sm:$0xff]
    %v190 = vld [vmem:[%s5] sm:$0x1]
    %v192 = vlaneseq
    %v193 = vshrl.u32 %v192, 7
    %v194 = vsub.s32 0, %v193
    %v195 = vrot.slane %v190, %v194
    %vm197 = vcmask 523264
    %v199 = vsel %vm197, %v181, 0
    %201 = vmatprep.subr.mxu0 0.0
    %202 = vmatpush1.msra.mxu0 %v182
    %203 = vmatprep.subr.mxu0 0.0
    %204 = vmatpush1.msra.mxu0 %v183
    %205 = vmatprep.subr.mxu0 0.0
    %206 = vmatpush1.msra.mxu0 %v184
    %207 = vmatprep.subr.mxu0 0.0
    %208 = vmatpush1.msra.mxu0 %v185
    %209 = vmatprep.subr.mxu0 0.0
    %210 = vmatpush1.msra.mxu0 %v186
    %211 = vmatprep.subr.mxu0 0.0
    %212 = vmatpush1.msra.mxu0 %v187
    %213 = vmatprep.subr.mxu0 0.0
    %214 = vmatpush1.msra.mxu0 %v188
    %215 = vmatprep.subr.mxu0 0.0
    %216 = vmatpush1.msra.mxu0 %v189
    %217 = vmatprep.subr.mxu0 0.0
    %218 = vmatpush1.msra.mxu0 0.0
    %219 = vmatprep.subr.mxu0 0.0
    %220 = vmatpush1.msra.mxu0 0.0
    %221 = vmatprep.subr.mxu0 0.0
    %222 = vmatpush1.msra.mxu0 0.0
    %223 = vmatprep.subr.mxu0 0.0
    %224 = vmatpush1.msra.mxu0 0.0
    %225 = vmatprep.subr.mxu0 0.0
    %226 = vmatpush1.msra.mxu0 0.0
    %227 = vmatprep.subr.mxu0 0.0
    %228 = vmatpush1.msra.mxu0 0.0
    %229 = vmatprep.subr.mxu0 0.0
    %230 = vmatpush1.msra.mxu0 0.0
    %231 = vmatprep.subr.mxu0 0.0
    %232 = vmatpush1.msra.mxu0 0.0
    %233 = vmatprep.subr.mxu0 0.0
    %234 = vmatpush1.msra.mxu0 0.0
    %235 = vmatprep.subr.mxu0 0.0
    %236 = vmatpush1.msra.mxu0 0.0
    %237 = vmatprep.subr.mxu0 0.0
    %238 = vmatpush1.msra.mxu0 0.0
    %239 = vmatprep.subr.mxu0 0.0
    %240 = vmatpush1.msra.mxu0 0.0
    %241 = vmatprep.subr.mxu0 0.0
    %242 = vmatpush1.msra.mxu0 0.0
    %243 = vmatprep.subr.mxu0 0.0
    %244 = vmatpush1.msra.mxu0 0.0
    %245 = vmatprep.subr.mxu0 0.0
    %246 = vmatpush1.msra.mxu0 0.0
    %247 = vmatprep.subr.mxu0 0.0
    %248 = vmatpush1.msra.mxu0 0.0
    %249 = vmatprep.subr.mxu0 0.0
    %250 = vmatpush1.msra.mxu0 0.0
    %251 = vmatprep.subr.mxu0 0.0
    %252 = vmatpush1.msra.mxu0 0.0
    %253 = vmatprep.subr.mxu0 0.0
    %254 = vmatpush1.msra.mxu0 0.0
    %255 = vmatprep.subr.mxu0 0.0
    %256 = vmatpush1.msra.mxu0 0.0
    %257 = vmatprep.subr.mxu0 0.0
    %258 = vmatpush1.msra.mxu0 0.0
    %259 = vmatprep.subr.mxu0 0.0
    %260 = vmatpush1.msra.mxu0 0.0
    %261 = vmatprep.subr.mxu0 0.0
    %262 = vmatpush1.msra.mxu0 0.0
    %263 = vmatprep.subr.mxu0 0.0
    %264 = vmatpush1.msra.mxu0 0.0
    %265 = vmatprep.mubr.f32.mxu0 0.0
    %266 = vmatmul.mubr.f32.gmra.mrb[0].mxu0 %v199
    %v267 = vpop.f32.mrb[0].mxu0
    %v268 = vadd.f32 %v195, %v267
    %v269 = vpop.f32.mrb[0].mxu0
    %270 = vdwg.mxu0
    %v271 = vld [vmem:[#allocation10] sm:$0xff]
    %v272 = vld [vmem:[#allocation10 + $0x8] sm:$0xff]
    %v273 = vld [vmem:[#allocation10 + $0x10] sm:$0xff]
    %v274 = vld [vmem:[#allocation10 + $0x18] sm:$0xff]
    %v275 = vld [vmem:[#allocation10 + $0x20] sm:$0xff]
    %v276 = vld [vmem:[#allocation10 + $0x28] sm:$0xff]
    %v277 = vld [vmem:[#allocation10 + $0x30] sm:$0xff]
    %v278 = vld [vmem:[#allocation10 + $0x38] sm:$0xff]
    %v279 = vld [vmem:[%s6] sm:$0x1]
    %v281 = vlaneseq
    %v282 = vshrl.u32 %v281, 7
    %v283 = vsub.s32 0, %v282
    %v284 = vrot.slane %v279, %v283
    %286 = vmatprep.subr.mxu0 0.0
    %287 = vmatpush1.msra.mxu0 %v271
    %288 = vmatprep.subr.mxu0 0.0
    %289 = vmatpush1.msra.mxu0 %v272
    %290 = vmatprep.subr.mxu0 0.0
    %291 = vmatpush1.msra.mxu0 %v273
    %292 = vmatprep.subr.mxu0 0.0
    %293 = vmatpush1.msra.mxu0 %v274
    %294 = vmatprep.subr.mxu0 0.0
    %295 = vmatpush1.msra.mxu0 %v275
    %296 = vmatprep.subr.mxu0 0.0
    %297 = vmatpush1.msra.mxu0 %v276
    %298 = vmatprep.subr.mxu0 0.0
    %299 = vmatpush1.msra.mxu0 %v277
    %300 = vmatprep.subr.mxu0 0.0
    %301 = vmatpush1.msra.mxu0 %v278
    %302 = vmatprep.subr.mxu0 0.0
    %303 = vmatpush1.msra.mxu0 0.0
    %304 = vmatprep.subr.mxu0 0.0
    %305 = vmatpush1.msra.mxu0 0.0
    %306 = vmatprep.subr.mxu0 0.0
    %307 = vmatpush1.msra.mxu0 0.0
    %308 = vmatprep.subr.mxu0 0.0
    %309 = vmatpush1.msra.mxu0 0.0
    %310 = vmatprep.subr.mxu0 0.0
    %311 = vmatpush1.msra.mxu0 0.0
    %312 = vmatprep.subr.mxu0 0.0
    %313 = vmatpush1.msra.mxu0 0.0
    %314 = vmatprep.subr.mxu0 0.0
    %315 = vmatpush1.msra.mxu0 0.0
    %316 = vmatprep.subr.mxu0 0.0
    %317 = vmatpush1.msra.mxu0 0.0
    %318 = vmatprep.subr.mxu0 0.0
    %319 = vmatpush1.msra.mxu0 0.0
    %320 = vmatprep.subr.mxu0 0.0
    %321 = vmatpush1.msra.mxu0 0.0
    %322 = vmatprep.subr.mxu0 0.0
    %323 = vmatpush1.msra.mxu0 0.0
    %324 = vmatprep.subr.mxu0 0.0
    %325 = vmatpush1.msra.mxu0 0.0
    %326 = vmatprep.subr.mxu0 0.0
    %327 = vmatpush1.msra.mxu0 0.0
    %328 = vmatprep.subr.mxu0 0.0
    %329 = vmatpush1.msra.mxu0 0.0
    %330 = vmatprep.subr.mxu0 0.0
    %331 = vmatpush1.msra.mxu0 0.0
    %332 = vmatprep.subr.mxu0 0.0
    %333 = vmatpush1.msra.mxu0 0.0
    %334 = vmatprep.subr.mxu0 0.0
    %335 = vmatpush1.msra.mxu0 0.0
    %336 = vmatprep.subr.mxu0 0.0
    %337 = vmatpush1.msra.mxu0 0.0
    %338 = vmatprep.subr.mxu0 0.0
    %339 = vmatpush1.msra.mxu0 0.0
    %340 = vmatprep.subr.mxu0 0.0
    %341 = vmatpush1.msra.mxu0 0.0
    %342 = vmatprep.subr.mxu0 0.0
    %343 = vmatpush1.msra.mxu0 0.0
    %344 = vmatprep.subr.mxu0 0.0
    %345 = vmatpush1.msra.mxu0 0.0
    %346 = vmatprep.subr.mxu0 0.0
    %347 = vmatpush1.msra.mxu0 0.0
    %348 = vmatprep.subr.mxu0 0.0
    %349 = vmatpush1.msra.mxu0 0.0
    %350 = vmatprep.mubr.f32.mxu0 0.0
    %351 = vmatmul.mubr.f32.gmra.mrb[0].mxu0 %v199
    %v352 = vpop.f32.mrb[0].mxu0
    %v353 = vadd.f32 %v284, %v352
    %v354 = vpop.f32.mrb[0].mxu0
    %355 = vdwg.mxu0
    %v356 = vmul.f32 %v180, %v268
    %v357 = vadd.f32 %v356, %v353
    %358 = vst [vmem:[#allocation11] sm:$0xf] %v357
    // Predicated region
    $region50: #{tpu_custom_call.1} parent=1 // pred_check
      _
    $region51: #{tpu_custom_call.1} parent=1 // pred_check_branch
      %360 = sbr.rel (0) target = $region53
    $region52: #{tpu_custom_call.1} parent=1 // pred_region
      %s362 = ssub.s32 64, 64
      %363 = vsyncadd [#allocation4], %s362
      %s365 = sshll.u32 [#allocation11], 4
      %s366 = int_to_ptr.vmem [resolvable:$true] %s365
      %368 = dma.vmem_to_hbm [thread:$0]  %s366, 64, %s7, [#allocation4]
    $region53: #{tpu_custom_call.1} parent=1 // pred_fallthru
      _
    // Predicated region
    $region54: #{tpu_custom_call.1} parent=1 // pred_check
      _
    $region55: #{tpu_custom_call.1} parent=1 // pred_check_branch
      %370 = sbr.rel (0) target = $region57
    $region56: #{tpu_custom_call.1} parent=1 // pred_region
      %371 = dma.done [#allocation4], 64
    $region57: #{tpu_custom_call.1} parent=1 // pred_fallthru
      _
    %372 = vsyncpa [#allocation3], 1
    %373 = vsyncpa [#allocation6], 1
    %374 = vsyncpa [#allocation9], 1
    %375 = vsyncpa [#allocation4], 1

// kernel: tpu_custom_call.1
$region0: #{tpu_custom_call.1}
  #allocation0 [shape = 'u32[]', space=smem, size = 0x4, offset = 0x4, fixed_abs, tag = 'smem constant byte address 0x4 - core index']
  #allocation1 [shape = 'u32[144,128]{1,0:T(1,128)}', space=vmem, size = 0x12000, scoped, tag = 'internal scratch']
  %s0 = inlined_call_operand.hbm [shape: f32[4,128], index: 0, kind: input, shape index: {}]
  %s1 = inlined_call_operand.hbm [shape: f32[4,64], index: 1, kind: input, shape index: {}]
  %s2 = inlined_call_operand.hbm [shape: f32[128,128], index: 2, kind: input, shape index: {}]
  %s3 = inlined_call_operand.hbm [shape: f32[64,128], index: 3, kind: input, shape index: {}]
  %s4 = inlined_call_operand.hbm [shape: f32[64,128], index: 4, kind: input, shape index: {}]
  %s5 = inlined_call_operand.vmem [shape: f32[1,128], index: 5, kind: input, shape index: {}]
  %s6 = inlined_call_operand.vmem [shape: f32[1,128], index: 6, kind: input, shape index: {}]
  %s7 = inlined_call_operand.hbm [shape: f32[4,128], index: 7, kind: output, shape index: {}]
  %s8 = sld [smem:[#allocation0]]
  $region58: #{tpu_custom_call.1} parent=0
    _
  %s10 = ssub.s32 1, %s8
  %s11 = scalar_select 0, %s10, %s8
  $region1: #{tpu_custom_call.1} parent=0
    #allocation2 [shape = 'u8[2048]{0}', space=vmem, size = 0x800, scoped, tag = 'input window, operand 0, single buffered']
    #allocation3 [shape = 's32[1]{0}', space=sflag, size = 0x4, scoped, tag = 'scoped memory for tpu_custom_call.1']
    #allocation4 [shape = 's32[1]{0}', space=sflag, size = 0x4, scoped, tag = 'scoped memory for tpu_custom_call.1']
    #allocation5 [shape = 'u8[2048]{0}', space=vmem, size = 0x800, scoped, tag = 'input window, operand 1, single buffered']
    #allocation6 [shape = 's32[1]{0}', space=sflag, size = 0x4, scoped, tag = 'scoped memory for tpu_custom_call.1']
    #allocation7 [shape = 'u8[65536]{0}', space=vmem, size = 0x10000, scoped, tag = 'input window, operand 2, single buffered']
    #allocation8 [shape = 'u8[32768]{0}', space=vmem, size = 0x8000, scoped, tag = 'input window, operand 3, single buffered']
    #allocation9 [shape = 's32[1]{0}', space=sflag, size = 0x4, scoped, tag = 'scoped memory for tpu_custom_call.1']
    #allocation10 [shape = 'u8[32768]{0}', space=vmem, size = 0x8000, scoped, tag = 'input window, operand 4, single buffered']
    #allocation11 [shape = 'u8[2048]{0}', space=vmem, size = 0x800, scoped, tag = 'output window, operand 0, single buffered']
    %12 = vsyncpa [#allocation3], 0
    %13 = vsyncpa [#allocation6], 0
    %14 = vsyncpa [#allocation9], 0
    %15 = vsyncpa [#allocation4], 0
    // Predicated region
    $region2: #{tpu_custom_call.1} parent=1 // pred_check
      _
    $region3: #{tpu_custom_call.1} parent=1 // pred_check_branch
      %17 = sbr.rel (0) target = $region5
    $region4: #{tpu_custom_call.1} parent=1 // pred_region
      %s19 = ssub.s32 64, 64
      %20 = vsyncadd [#allocation3], %s19
      %s22 = sshll.u32 [#allocation2], 4
      %s23 = int_to_ptr.vmem [resolvable:$true] %s22
      %25 = dma.hbm_to_vmem [thread:$0]  %s0, 64, %s23, [#allocation3]
    $region5: #{tpu_custom_call.1} parent=1 // pred_fallthru
      _
    // Predicated region
    $region6: #{tpu_custom_call.1} parent=1 // pred_check
      _
    $region7: #{tpu_custom_call.1} parent=1 // pred_check_branch
      %27 = sbr.rel (0) target = $region9
    $region8: #{tpu_custom_call.1} parent=1 // pred_region
      %s29 = ssub.s32 64, 64
      %30 = vsyncadd [#allocation6], %s29
      %s32 = sshll.u32 [#allocation5], 4
      %s33 = int_to_ptr.vmem [resolvable:$true] %s32
      %35 = dma.hbm_to_vmem [thread:$0]  %s1, 64, %s33, [#allocation6]
    $region9: #{tpu_custom_call.1} parent=1 // pred_fallthru
      _
    // Predicated region
    $region10: #{tpu_custom_call.1} parent=1 // pred_check
      _
    $region11: #{tpu_custom_call.1} parent=1 // pred_check_branch
      %37 = sbr.rel (0) target = $region13
    $region12: #{tpu_custom_call.1} parent=1 // pred_region
      %s39 = ssub.s32 2048, 2048
      %40 = vsyncadd [#allocation6], %s39
      %s41 = sshll.u32 [#allocation7], 4
      %s42 = int_to_ptr.vmem [resolvable:$true] %s41
      %47 = dma.hbm_to_vmem [thread:$0]  %s2, 2048, %s42, [#allocation6], 128, 128, 8
    $region13: #{tpu_custom_call.1} parent=1 // pred_fallthru
      _
    // Predicated region
    $region14: #{tpu_custom_call.1} parent=1 // pred_check
      _
    $region15: #{tpu_custom_call.1} parent=1 // pred_check_branch
      %49 = sbr.rel (0) target = $region17
    $region16: #{tpu_custom_call.1} parent=1 // pred_region
      %s51 = ssub.s32 1024, 1024
      %52 = vsyncadd [#allocation9], %s51
      %s53 = sshll.u32 [#allocation8], 4
      %s54 = int_to_ptr.vmem [resolvable:$true] %s53
      %59 = dma.hbm_to_vmem [thread:$0]  %s3, 1024, %s54, [#allocation9], 128, 128, 8
    $region17: #{tpu_custom_call.1} parent=1 // pred_fallthru
      _
    // Predicated region
    $region18: #{tpu_custom_call.1} parent=1 // pred_check
      _
    $region19: #{tpu_custom_call.1} parent=1 // pred_check_branch
      %61 = sbr.rel (0) target = $region21
    $region20: #{tpu_custom_call.1} parent=1 // pred_region
      %s63 = ssub.s32 1024, 1024
      %64 = vsyncadd [#allocation9], %s63
      %s65 = sshll.u32 [#allocation10], 4
      %s66 = int_to_ptr.vmem [resolvable:$true] %s65
      %71 = dma.hbm_to_vmem [thread:$0]  %s4, 1024, %s66, [#allocation9], 128, 128, 8
    $region21: #{tpu_custom_call.1} parent=1 // pred_fallthru
      _
    // Predicated region
    $region22: #{tpu_custom_call.1} parent=1 // pred_check
      _
    $region23: #{tpu_custom_call.1} parent=1 // pred_check_branch
      %73 = sbr.rel (0) target = $region25
    $region24: #{tpu_custom_call.1} parent=1 // pred_region
      _
    $region25: #{tpu_custom_call.1} parent=1 // pred_fallthru
      _
    // Predicated region
    $region26: #{tpu_custom_call.1} parent=1 // pred_check
      _
    $region27: #{tpu_custom_call.1} parent=1 // pred_check_branch
      %75 = sbr.rel (0) target = $region29
    $region28: #{tpu_custom_call.1} parent=1 // pred_region
      _
    $region29: #{tpu_custom_call.1} parent=1 // pred_fallthru
      _
    // Predicated region
    $region30: #{tpu_custom_call.1} parent=1 // pred_check
      _
    $region31: #{tpu_custom_call.1} parent=1 // pred_check_branch
      %77 = sbr.rel (0) target = $region33
    $region32: #{tpu_custom_call.1} parent=1 // pred_region
      %78 = dma.done [#allocation3], 64
    $region33: #{tpu_custom_call.1} parent=1 // pred_fallthru
      _
    // Predicated region
    $region34: #{tpu_custom_call.1} parent=1 // pred_check
      _
    $region35: #{tpu_custom_call.1} parent=1 // pred_check_branch
      %80 = sbr.rel (0) target = $region37
    $region36: #{tpu_custom_call.1} parent=1 // pred_region
      %81 = dma.done [#allocation6], 64
    $region37: #{tpu_custom_call.1} parent=1 // pred_fallthru
      _
    // Predicated region
    $region38: #{tpu_custom_call.1} parent=1 // pred_check
      _
    $region39: #{tpu_custom_call.1} parent=1 // pred_check_branch
      %83 = sbr.rel (0) target = $region41
    $region40: #{tpu_custom_call.1} parent=1 // pred_region
      %84 = dma.done [#allocation6], 2048
    $region41: #{tpu_custom_call.1} parent=1 // pred_fallthru
      _
    // Predicated region
    $region42: #{tpu_custom_call.1} parent=1 // pred_check
      _
    $region43: #{tpu_custom_call.1} parent=1 // pred_check_branch
      %86 = sbr.rel (0) target = $region45
    $region44: #{tpu_custom_call.1} parent=1 // pred_region
      %87 = dma.done [#allocation9], 1024
    $region45: #{tpu_custom_call.1} parent=1 // pred_fallthru
      _
    // Predicated region
    $region46: #{tpu_custom_call.1} parent=1 // pred_check
      _
    $region47: #{tpu_custom_call.1} parent=1 // pred_check_branch
      %89 = sbr.rel (0) target = $region49
    $region48: #{tpu_custom_call.1} parent=1 // pred_region
      %90 = dma.done [#allocation9], 1024
    $region49: #{tpu_custom_call.1} parent=1 // pred_fallthru
      _
    %v91 = vld [vmem:[#allocation2] sm:$0xf]
    %v92 = vmul.f32 %v91, %v91
    %v93 = vld [vmem:[#allocation7] sm:$0xff]
    %v94 = vld [vmem:[#allocation7 + $0x8] sm:$0xff]
    %v95 = vld [vmem:[#allocation7 + $0x10] sm:$0xff]
    %v96 = vld [vmem:[#allocation7 + $0x18] sm:$0xff]
    %v97 = vld [vmem:[#allocation7 + $0x20] sm:$0xff]
    %v98 = vld [vmem:[#allocation7 + $0x28] sm:$0xff]
    %v99 = vld [vmem:[#allocation7 + $0x30] sm:$0xff]
    %v100 = vld [vmem:[#allocation7 + $0x38] sm:$0xff]
    %v101 = vld [vmem:[#allocation7 + $0x40] sm:$0xff]
    %v102 = vld [vmem:[#allocation7 + $0x48] sm:$0xff]
    %v103 = vld [vmem:[#allocation7 + $0x50] sm:$0xff]
    %v104 = vld [vmem:[#allocation7 + $0x58] sm:$0xff]
    %v105 = vld [vmem:[#allocation7 + $0x60] sm:$0xff]
    %v106 = vld [vmem:[#allocation7 + $0x68] sm:$0xff]
    %v107 = vld [vmem:[#allocation7 + $0x70] sm:$0xff]
    %v108 = vld [vmem:[#allocation7 + $0x78] sm:$0xff]
    %109 = vmatprep.subr.mxu0 0.0
    %110 = vmatpush1.msra.mxu0 %v93
    %111 = vmatprep.subr.mxu0 0.0
    %112 = vmatpush1.msra.mxu0 %v94
    %113 = vmatprep.subr.mxu0 0.0
    %114 = vmatpush1.msra.mxu0 %v95
    %115 = vmatprep.subr.mxu0 0.0
    %116 = vmatpush1.msra.mxu0 %v96
    %117 = vmatprep.subr.mxu0 0.0
    %118 = vmatpush1.msra.mxu0 %v97
    %119 = vmatprep.subr.mxu0 0.0
    %120 = vmatpush1.msra.mxu0 %v98
    %121 = vmatprep.subr.mxu0 0.0
    %122 = vmatpush1.msra.mxu0 %v99
    %123 = vmatprep.subr.mxu0 0.0
    %124 = vmatpush1.msra.mxu0 %v100
    %125 = vmatprep.subr.mxu0 0.0
    %126 = vmatpush1.msra.mxu0 %v101
    %127 = vmatprep.subr.mxu0 0.0
    %128 = vmatpush1.msra.mxu0 %v102
    %129 = vmatprep.subr.mxu0 0.0
    %130 = vmatpush1.msra.mxu0 %v103
    %131 = vmatprep.subr.mxu0 0.0
    %132 = vmatpush1.msra.mxu0 %v104
    %133 = vmatprep.subr.mxu0 0.0
    %134 = vmatpush1.msra.mxu0 %v105
    %135 = vmatprep.subr.mxu0 0.0
    %136 = vmatpush1.msra.mxu0 %v106
    %137 = vmatprep.subr.mxu0 0.0
    %138 = vmatpush1.msra.mxu0 %v107
    %139 = vmatprep.subr.mxu0 0.0
    %140 = vmatpush1.msra.mxu0 %v108
    %141 = vmatprep.subr.mxu0 0.0
    %142 = vmatpush1.msra.mxu0 0.0
    %143 = vmatprep.subr.mxu0 0.0
    %144 = vmatpush1.msra.mxu0 0.0
    %145 = vmatprep.subr.mxu0 0.0
    %146 = vmatpush1.msra.mxu0 0.0
    %147 = vmatprep.subr.mxu0 0.0
    %148 = vmatpush1.msra.mxu0 0.0
    %149 = vmatprep.subr.mxu0 0.0
    %150 = vmatpush1.msra.mxu0 0.0
    %151 = vmatprep.subr.mxu0 0.0
    %152 = vmatpush1.msra.mxu0 0.0
    %153 = vmatprep.subr.mxu0 0.0
    %154 = vmatpush1.msra.mxu0 0.0
    %155 = vmatprep.subr.mxu0 0.0
    %156 = vmatpush1.msra.mxu0 0.0
    %157 = vmatprep.subr.mxu0 0.0
    %158 = vmatpush1.msra.mxu0 0.0
    %159 = vmatprep.subr.mxu0 0.0
    %160 = vmatpush1.msra.mxu0 0.0
    %161 = vmatprep.subr.mxu0 0.0
    %162 = vmatpush1.msra.mxu0 0.0
    %163 = vmatprep.subr.mxu0 0.0
    %164 = vmatpush1.msra.mxu0 0.0
    %165 = vmatprep.subr.mxu0 0.0
    %166 = vmatpush1.msra.mxu0 0.0
    %167 = vmatprep.subr.mxu0 0.0
    %168 = vmatpush1.msra.mxu0 0.0
    %169 = vmatprep.subr.mxu0 0.0
    %170 = vmatpush1.msra.mxu0 0.0
    %171 = vmatprep.subr.mxu0 0.0
    %172 = vmatpush1.msra.mxu0 0.0
    %173 = vmatprep.mubr.f32.mxu0 0.0
    %174 = vmatmul.mubr.f32.gmra.mrb[0].mxu0 %v92
    %v175 = vpop.f32.mrb[0].mxu0
    %v176 = vadd.f32 0.0001, %v175
    %v177 = vpop.f32.mrb[0].mxu0
    %178 = vdwg.mxu0
    %v179 = vrsqrt.pop %v176
    %v180 = vmul.f32 %v91, %v179
    %v181 = vld [vmem:[#allocation5] sm:$0xf]
    %v182 = vld [vmem:[#allocation8] sm:$0xff]
    %v183 = vld [vmem:[#allocation8 + $0x8] sm:$0xff]
    %v184 = vld [vmem:[#allocation8 + $0x10] sm:$0xff]
    %v185 = vld [vmem:[#allocation8 + $0x18] sm:$0xff]
    %v186 = vld [vmem:[#allocation8 + $0x20] sm:$0xff]
    %v187 = vld [vmem:[#allocation8 + $0x28] sm:$0xff]
    %v188 = vld [vmem:[#allocation8 + $0x30] sm:$0xff]
    %v189 = vld [vmem:[#allocation8 + $0x38] sm:$0xff]
    %v190 = vld [vmem:[%s5] sm:$0x1]
    %v192 = vlaneseq
    %v193 = vshrl.u32 %v192, 7
    %v194 = vsub.s32 0, %v193
    %v195 = vrot.slane %v190, %v194
    %vm197 = vcmask 523264
    %v199 = vsel %vm197, %v181, 0
    %201 = vmatprep.subr.mxu0 0.0
    %202 = vmatpush1.msra.mxu0 %v182
    %203 = vmatprep.subr.mxu0 0.0
    %204 = vmatpush1.msra.mxu0 %v183
    %205 = vmatprep.subr.mxu0 0.0
    %206 = vmatpush1.msra.mxu0 %v184
    %207 = vmatprep.subr.mxu0 0.0
    %208 = vmatpush1.msra.mxu0 %v185
    %209 = vmatprep.subr.mxu0 0.0
    %210 = vmatpush1.msra.mxu0 %v186
    %211 = vmatprep.subr.mxu0 0.0
    %212 = vmatpush1.msra.mxu0 %v187
    %213 = vmatprep.subr.mxu0 0.0
    %214 = vmatpush1.msra.mxu0 %v188
    %215 = vmatprep.subr.mxu0 0.0
    %216 = vmatpush1.msra.mxu0 %v189
    %217 = vmatprep.subr.mxu0 0.0
    %218 = vmatpush1.msra.mxu0 0.0
    %219 = vmatprep.subr.mxu0 0.0
    %220 = vmatpush1.msra.mxu0 0.0
    %221 = vmatprep.subr.mxu0 0.0
    %222 = vmatpush1.msra.mxu0 0.0
    %223 = vmatprep.subr.mxu0 0.0
    %224 = vmatpush1.msra.mxu0 0.0
    %225 = vmatprep.subr.mxu0 0.0
    %226 = vmatpush1.msra.mxu0 0.0
    %227 = vmatprep.subr.mxu0 0.0
    %228 = vmatpush1.msra.mxu0 0.0
    %229 = vmatprep.subr.mxu0 0.0
    %230 = vmatpush1.msra.mxu0 0.0
    %231 = vmatprep.subr.mxu0 0.0
    %232 = vmatpush1.msra.mxu0 0.0
    %233 = vmatprep.subr.mxu0 0.0
    %234 = vmatpush1.msra.mxu0 0.0
    %235 = vmatprep.subr.mxu0 0.0
    %236 = vmatpush1.msra.mxu0 0.0
    %237 = vmatprep.subr.mxu0 0.0
    %238 = vmatpush1.msra.mxu0 0.0
    %239 = vmatprep.subr.mxu0 0.0
    %240 = vmatpush1.msra.mxu0 0.0
    %241 = vmatprep.subr.mxu0 0.0
    %242 = vmatpush1.msra.mxu0 0.0
    %243 = vmatprep.subr.mxu0 0.0
    %244 = vmatpush1.msra.mxu0 0.0
    %245 = vmatprep.subr.mxu0 0.0
    %246 = vmatpush1.msra.mxu0 0.0
    %247 = vmatprep.subr.mxu0 0.0
    %248 = vmatpush1.msra.mxu0 0.0
    %249 = vmatprep.subr.mxu0 0.0
    %250 = vmatpush1.msra.mxu0 0.0
    %251 = vmatprep.subr.mxu0 0.0
    %252 = vmatpush1.msra.mxu0 0.0
    %253 = vmatprep.subr.mxu0 0.0
    %254 = vmatpush1.msra.mxu0 0.0
    %255 = vmatprep.subr.mxu0 0.0
    %256 = vmatpush1.msra.mxu0 0.0
    %257 = vmatprep.subr.mxu0 0.0
    %258 = vmatpush1.msra.mxu0 0.0
    %259 = vmatprep.subr.mxu0 0.0
    %260 = vmatpush1.msra.mxu0 0.0
    %261 = vmatprep.subr.mxu0 0.0
    %262 = vmatpush1.msra.mxu0 0.0
    %263 = vmatprep.subr.mxu0 0.0
    %264 = vmatpush1.msra.mxu0 0.0
    %265 = vmatprep.mubr.f32.mxu0 0.0
    %266 = vmatmul.mubr.f32.gmra.mrb[0].mxu0 %v199
    %v267 = vpop.f32.mrb[0].mxu0
    %v268 = vadd.f32 %v195, %v267
    %v269 = vpop.f32.mrb[0].mxu0
    %270 = vdwg.mxu0
    %v271 = vld [vmem:[#allocation10] sm:$0xff]
    %v272 = vld [vmem:[#allocation10 + $0x8] sm:$0xff]
    %v273 = vld [vmem:[#allocation10 + $0x10] sm:$0xff]
    %v274 = vld [vmem:[#allocation10 + $0x18] sm:$0xff]
    %v275 = vld [vmem:[#allocation10 + $0x20] sm:$0xff]
    %v276 = vld [vmem:[#allocation10 + $0x28] sm:$0xff]
    %v277 = vld [vmem:[#allocation10 + $0x30] sm:$0xff]
    %v278 = vld [vmem:[#allocation10 + $0x38] sm:$0xff]
    %v279 = vld [vmem:[%s6] sm:$0x1]
    %v281 = vlaneseq
    %v282 = vshrl.u32 %v281, 7
    %v283 = vsub.s32 0, %v282
    %v284 = vrot.slane %v279, %v283
    %286 = vmatprep.subr.mxu0 0.0
    %287 = vmatpush1.msra.mxu0 %v271
    %288 = vmatprep.subr.mxu0 0.0
    %289 = vmatpush1.msra.mxu0 %v272
    %290 = vmatprep.subr.mxu0 0.0
    %291 = vmatpush1.msra.mxu0 %v273
    %292 = vmatprep.subr.mxu0 0.0
    %293 = vmatpush1.msra.mxu0 %v274
    %294 = vmatprep.subr.mxu0 0.0
    %295 = vmatpush1.msra.mxu0 %v275
    %296 = vmatprep.subr.mxu0 0.0
    %297 = vmatpush1.msra.mxu0 %v276
    %298 = vmatprep.subr.mxu0 0.0
    %299 = vmatpush1.msra.mxu0 %v277
    %300 = vmatprep.subr.mxu0 0.0
    %301 = vmatpush1.msra.mxu0 %v278
    %302 = vmatprep.subr.mxu0 0.0
    %303 = vmatpush1.msra.mxu0 0.0
    %304 = vmatprep.subr.mxu0 0.0
    %305 = vmatpush1.msra.mxu0 0.0
    %306 = vmatprep.subr.mxu0 0.0
    %307 = vmatpush1.msra.mxu0 0.0
    %308 = vmatprep.subr.mxu0 0.0
    %309 = vmatpush1.msra.mxu0 0.0
    %310 = vmatprep.subr.mxu0 0.0
    %311 = vmatpush1.msra.mxu0 0.0
    %312 = vmatprep.subr.mxu0 0.0
    %313 = vmatpush1.msra.mxu0 0.0
    %314 = vmatprep.subr.mxu0 0.0
    %315 = vmatpush1.msra.mxu0 0.0
    %316 = vmatprep.subr.mxu0 0.0
    %317 = vmatpush1.msra.mxu0 0.0
    %318 = vmatprep.subr.mxu0 0.0
    %319 = vmatpush1.msra.mxu0 0.0
    %320 = vmatprep.subr.mxu0 0.0
    %321 = vmatpush1.msra.mxu0 0.0
    %322 = vmatprep.subr.mxu0 0.0
    %323 = vmatpush1.msra.mxu0 0.0
    %324 = vmatprep.subr.mxu0 0.0
    %325 = vmatpush1.msra.mxu0 0.0
    %326 = vmatprep.subr.mxu0 0.0
    %327 = vmatpush1.msra.mxu0 0.0
    %328 = vmatprep.subr.mxu0 0.0
    %329 = vmatpush1.msra.mxu0 0.0
    %330 = vmatprep.subr.mxu0 0.0
    %331 = vmatpush1.msra.mxu0 0.0
    %332 = vmatprep.subr.mxu0 0.0
    %333 = vmatpush1.msra.mxu0 0.0
    %334 = vmatprep.subr.mxu0 0.0
    %335 = vmatpush1.msra.mxu0 0.0
    %336 = vmatprep.subr.mxu0 0.0
    %337 = vmatpush1.msra.mxu0 0.0
    %338 = vmatprep.subr.mxu0 0.0
    %339 = vmatpush1.msra.mxu0 0.0
    %340 = vmatprep.subr.mxu0 0.0
    %341 = vmatpush1.msra.mxu0 0.0
    %342 = vmatprep.subr.mxu0 0.0
    %343 = vmatpush1.msra.mxu0 0.0
    %344 = vmatprep.subr.mxu0 0.0
    %345 = vmatpush1.msra.mxu0 0.0
    %346 = vmatprep.subr.mxu0 0.0
    %347 = vmatpush1.msra.mxu0 0.0
    %348 = vmatprep.subr.mxu0 0.0
    %349 = vmatpush1.msra.mxu0 0.0
    %350 = vmatprep.mubr.f32.mxu0 0.0
    %351 = vmatmul.mubr.f32.gmra.mrb[0].mxu0 %v199
    %v352 = vpop.f32.mrb[0].mxu0
    %v353 = vadd.f32 %v284, %v352
    %v354 = vpop.f32.mrb[0].mxu0
    %355 = vdwg.mxu0
    %v356 = vmul.f32 %v180, %v268
    %v357 = vadd.f32 %v356, %v353
    %358 = vst [vmem:[#allocation11] sm:$0xf] %v357
    // Predicated region
    $region50: #{tpu_custom_call.1} parent=1 // pred_check
      _
    $region51: #{tpu_custom_call.1} parent=1 // pred_check_branch
      %360 = sbr.rel (0) target = $region53
    $region52: #{tpu_custom_call.1} parent=1 // pred_region
      %s362 = ssub.s32 64, 64
      %363 = vsyncadd [#allocation4], %s362
      %s365 = sshll.u32 [#allocation11], 4
      %s366 = int_to_ptr.vmem [resolvable:$true] %s365
      %368 = dma.vmem_to_hbm [thread:$0]  %s366, 64, %s7, [#allocation4]
    $region53: #{tpu_custom_call.1} parent=1 // pred_fallthru
      _
    // Predicated region
    $region54: #{tpu_custom_call.1} parent=1 // pred_check
      _
    $region55: #{tpu_custom_call.1} parent=1 // pred_check_branch
      %370 = sbr.rel (0) target = $region57
    $region56: #{tpu_custom_call.1} parent=1 // pred_region
      %371 = dma.done [#allocation4], 64
    $region57: #{tpu_custom_call.1} parent=1 // pred_fallthru
      _
    %372 = vsyncpa [#allocation3], 1
    %373 = vsyncpa [#allocation6], 1
    %374 = vsyncpa [#allocation9], 1
    %375 = vsyncpa [#allocation4], 1

</llo_original>
